<compile_context>
chip_gen: v7x
topology: tpu7x:2x2x1
jax: 0.10.0
libtpu: 0.0.40
codegen_flags: <defaults>
</compile_context>

<pallas_src>
from functools import partial

import jax
import jax.numpy as jnp
from jax import lax
from jax.experimental import pallas as pl
from jax.experimental.pallas import tpu as pltpu


_LANE = 128       # TPU vreg lane width
_SUBLANE = 16     # bf16 sublane packing (also satisfies the f32 requirement of 8)
_TM_MAX = 512     # conv row-tile cap: 2x(512 x 4096 bf16) + weight + 2x out << 32 MiB
_VMEM_LIMIT = 32 * 1024 * 1024   # explicit scoped-VMEM budget (fits v5e/v6e/v7x)


def _round_up(x, m):
    return (x + m - 1) // m * m


# -----------------------------------------------------------------------------
# Feature extractor: stack of Conv1d(bias=False) + ReLU layers (wav2vec-style).
# 128 output channels keep every matmul output and Sinkhorn cost matrix
# lane-dense without extra channel padding.
# TODO(synk): wav2vec's feature_extractor also applies dropout (no-op in eval),
#             group-norm and optional log-compression; omitted here.
# -----------------------------------------------------------------------------

# (out_channels, kernel_size, stride) — synthetic analogue of the wav2vec_large
# conv stack [(512,10,5),(512,8,4),(512,4,2),...]
CONV_LAYERS = [(128, 10, 5), (128, 8, 4), (128, 4, 2)]


def _matmul_relu_kernel(a_ref, w_ref, o_ref):
    # a: (TM, CK) bf16 im2col patch tile;  w: (CK, C_out) bf16, grid-resident.
    acc = jnp.dot(a_ref[...], w_ref[...], preferred_element_type=jnp.float32)
    o_ref[...] = jnp.maximum(acc, 0.0)


def conv1d_relu_blc(x, w, stride):
    """x: (B, L, C_in) f32, w: (C_out, C_in, K) f32 -> (B, L_out, C_out) f32."""
    B, L, C_in = x.shape
    C_out, _, K = w.shape
    L_out = (L - K) // stride + 1

    # im2col (plain JAX glue): strided frames in (K, C_in) order.
    # TODO(synk): could be built in-kernel from a VMEM-resident input strip with
    #             strided pl.ds reads to avoid duplicating the K/stride overlap
    #             bytes in HBM.
    idx = jnp.arange(L_out)[:, None] * stride + jnp.arange(K)[None, :]   # (L_out, K)
    patches = x[:, idx, :]                                               # (B, L_out, K, C_in)
    patches = patches.reshape(B * L_out, K * C_in)
    w2 = jnp.transpose(w, (2, 1, 0)).reshape(K * C_in, C_out)            # (K*C_in, C_out)

    # Pad contraction dim to a lane multiple and rows to the tile size.
    CK = K * C_in
    CK_pad = _round_up(CK, _LANE)
    rows = B * L_out
    TM = min(_TM_MAX, _round_up(rows, _SUBLANE))
    rows_pad = _round_up(rows, TM)

    patches = jnp.pad(patches, ((0, rows_pad - rows), (0, CK_pad - CK)))
    w2 = jnp.pad(w2, ((0, CK_pad - CK), (0, 0)))

    # MXU is natively bf16; bf16 patches also halve the dominant DMA bytes.
    patches = patches.astype(jnp.bfloat16)
    w2 = w2.astype(jnp.bfloat16)

    out = pl.pallas_call(
        _matmul_relu_kernel,
        out_shape=jax.ShapeDtypeStruct((rows_pad, C_out), jnp.float32),
        grid=(rows_pad // TM,),
        in_specs=[pl.BlockSpec((TM, CK_pad), lambda i: (i, 0)),
                  pl.BlockSpec((CK_pad, C_out), lambda i: (0, 0))],
        out_specs=pl.BlockSpec((TM, C_out), lambda i: (i, 0)),
        compiler_params=pltpu.CompilerParams(
            dimension_semantics=("parallel",),
            vmem_limit_bytes=_VMEM_LIMIT),
    )(patches, w2)

    return out[:rows].reshape(B, L_out, C_out)


def init_feature_extractor_params(key):
    params = []
    c_in = 1
    for (c_out, k, s) in CONV_LAYERS:
        key, sub = jax.random.split(key)
        scale = 1.0 / jnp.sqrt(jnp.float32(c_in * k))
        w = jax.random.normal(sub, (c_out, c_in, k), jnp.float32) * scale
        params.append((w, s))
        c_in = c_out
    return params


def feature_extractor(params, wav):
    """wav: (B, T) -> features (B, C, L') (matching wav2vec's NCL output)."""
    x = wav[:, :, None]                     # internal (B, L, C) layout
    for w, s in params:
        x = conv1d_relu_blc(x, w, s)        # (B, L_out, C)
    return jnp.transpose(x, (0, 2, 1))      # (B, C, L') — wav2vec semantics


# -----------------------------------------------------------------------------
# SamplesLoss ("sinkhorn", p=2, blur=0.05) — debiased Sinkhorn divergence.
# Features (B, C, L') are interpreted as B point clouds of N=C samples in
# D=L' dimensions, exactly how geomloss treats a 3-D tensor.
# TODO(synk): geomloss uses an epsilon-scaling schedule; here we use a fixed
#             epsilon = blur**p and a fixed iteration count.
# -----------------------------------------------------------------------------

def _sinkhorn_kernel(x_ref, y_ref, o_ref, *, inv_eps, eps, n_iters):
    x = x_ref[0].astype(jnp.float32)   # (N, D)
    y = y_ref[0].astype(jnp.float32)   # (M, D)
    N = x.shape[0]
    M = y.shape[0]

    def cost_over_eps(a, b):
        # C_ij / eps, with C_ij = 0.5 * ||a_i - b_j||^2  (geomloss p=2 cost).
        # dot_general contracts the last dims of both operands directly (no
        # explicit transpose of b before the MXU).
        aa = jnp.sum(a * a, axis=1, keepdims=True)                       # (n, 1)
        bb = jnp.sum(b * b, axis=1, keepdims=True)                       # (m, 1)
        ab = lax.dot_general(a, b, (((1,), (1,)), ((), ())),
                             preferred_element_type=jnp.float32)         # (n, m)
        return (0.5 * aa + 0.5 * bb.T - ab) * inv_eps

    def lse_rows(t):   # logsumexp over axis 1 (lanes), keepdims
        m = jnp.max(t, axis=1, keepdims=True)
        return m + jnp.log(jnp.sum(jnp.exp(t - m), axis=1, keepdims=True))

    def lse_cols(t):   # logsumexp over axis 0 (sublanes), keepdims
        m = jnp.max(t, axis=0, keepdims=True)
        return m + jnp.log(jnp.sum(jnp.exp(t - m), axis=0, keepdims=True))

    def ot_cross(Ce, n, m):
        # Alternating log-domain Sinkhorn; potentials kept in eps-scaled units
        # (1/eps hoisted out of the loop), uniform weights 1/n, 1/m.
        la = -jnp.log(jnp.float32(n))
        lb = -jnp.log(jnp.float32(m))
        f0 = jnp.zeros((Ce.shape[0], 1), jnp.float32)
        g0 = jnp.zeros((1, Ce.shape[1]), jnp.float32)

        def body(_, fg):
            f, g = fg
            g_new = -lse_cols(f - Ce + la)      # (1, m)
            f_new = -lse_rows(g_new - Ce + lb)  # (n, 1)
            return (f_new, g_new)

        f, g = lax.fori_loop(0, n_iters, body, (f0, g0))
        return eps * (jnp.sum(f) / jnp.float32(n) + jnp.sum(g) / jnp.float32(m))

    def ot_sym(Ce, n):
        # Symmetric (debias) problem: cost is symmetric and both potentials
        # coincide, so one logsumexp per averaged update suffices.
        la = -jnp.log(jnp.float32(n))
        u0 = jnp.zeros((1, Ce.shape[1]), jnp.float32)   # eps-scaled potential (row)

        def body(_, u):
            t = -lse_rows(u - Ce + la)                  # T(u), comes out (n, 1)
            return 0.5 * (u + t.reshape(1, n))          # fold back to a row

        u = lax.fori_loop(0, n_iters, body, u0)
        return 2.0 * eps * jnp.sum(u) / jnp.float32(n)

    ot_xy = ot_cross(cost_over_eps(x, y), N, M)
    ot_xx = ot_sym(cost_over_eps(x, x), N)
    ot_yy = ot_sym(cost_over_eps(y, y), M)
    res = ot_xy - 0.5 * (ot_xx + ot_yy)

    # One lane-aligned (1, 1, 128) output tile per batch element.
    o_ref[...] = jnp.broadcast_to(res, o_ref.shape).astype(jnp.float32)


def sinkhorn_divergence(x, y, *, blur=0.05, p=2, n_iters=50):
    """x, y: (B, N, D) point clouds -> (B,) Sinkhorn divergences."""
    B, N, D = x.shape
    _, M, _ = y.shape
    eps = float(blur) ** p

    # Zero-pad the feature dim to a lane multiple: squared distances (and hence
    # the divergence) are unchanged, and every reduction fills full vregs.
    D_pad = _round_up(D, _LANE)
    if D_pad != D:
        x = jnp.pad(x, ((0, 0), (0, 0), (0, D_pad - D)))
        y = jnp.pad(y, ((0, 0), (0, 0), (0, D_pad - D)))

    kernel = partial(_sinkhorn_kernel, inv_eps=1.0 / eps, eps=eps, n_iters=n_iters)
    out = pl.pallas_call(
        kernel,
        out_shape=jax.ShapeDtypeStruct((B, 1, _LANE), jnp.float32),
        grid=(B,),
        in_specs=[pl.BlockSpec((1, N, D_pad), lambda b: (b, 0, 0)),
                  pl.BlockSpec((1, M, D_pad), lambda b: (b, 0, 0))],
        out_specs=pl.BlockSpec((1, 1, _LANE), lambda b: (b, 0, 0)),
        compiler_params=pltpu.CompilerParams(
            dimension_semantics=("parallel",),   # independent per batch element
            vmem_limit_bytes=_VMEM_LIMIT),
    )(x.astype(jnp.float32), y.astype(jnp.float32))
    return out[:, 0, 0]


# -----------------------------------------------------------------------------
# PerceptualLoss.forward: feat = model(y_hat), model(y); wass_dist(feat_h, feat)
# -----------------------------------------------------------------------------

def perceptual_loss(params, y_hat, y):
    f_hat = feature_extractor(params, y_hat)   # (B, C, L')
    f_ref = feature_extractor(params, y)       # (B, C, L')
    # geomloss SamplesLoss on 3-D tensors: dim1 = samples, dim2 = features.
    return sinkhorn_divergence(f_hat, f_ref)   # (B,)


if __name__ == "__main__":
    key = jax.random.PRNGKey(0)
    k1, k2, kw = jax.random.split(key, 3)

    B, T = 2, 256                                   # small raw-audio batch
    y_hat = jax.random.normal(k1, (B, T), jnp.float32)
    y = jax.random.normal(k2, (B, T), jnp.float32)

    params = init_feature_extractor_params(kw)
    loss = perceptual_loss(params, y_hat, y)        # shape (B,)
    loss = jax.block_until_ready(loss)
    assert loss.shape == (B,) and bool(jnp.all(jnp.isfinite(loss)))
    print("KERNEL_OK")
</pallas_src>

<mosaic_0001>
module attributes {stable_mosaic.version = 11 : i64} {
  func.func @_matmul_relu_kernel(%arg0: i32, %arg1: memref<112x128xbf16, #tpu.memory_space<vmem>>, %arg2: memref<128x128xbf16, #tpu.memory_space<vmem>>, %arg3: memref<112x128xf32, #tpu.memory_space<vmem>>) attributes {dimension_semantics = [#tpu.dimension_semantics<parallel>], iteration_bounds = array<i64: 1>, scalar_prefetch = 0 : i64, scratch_operands = 0 : i64, tpu.core_type = #tpu.core_type<tc>, window_params = [{transform_indices = @transform_0, window_bounds = array<i64: 112, 128>}, {pipeline_mode = #tpu.pipeline_mode<synchronous>, transform_indices = @transform_1, window_bounds = array<i64: 128, 128>}, {transform_indices = @transform_2, window_bounds = array<i64: 112, 128>}]} {
    %c0 = arith.constant 0 : index
    %c0_0 = arith.constant 0 : index
    %0 = vector.load %arg1[%c0, %c0_0] : memref<112x128xbf16, #tpu.memory_space<vmem>>, vector<112x128xbf16>
    %c0_1 = arith.constant 0 : index
    %c0_2 = arith.constant 0 : index
    %1 = vector.load %arg2[%c0_1, %c0_2] : memref<128x128xbf16, #tpu.memory_space<vmem>>, vector<128x128xbf16>
    %cst = arith.constant dense<0.000000e+00> : vector<112x128xf32>
    %2 = tpu.matmul %0, %1, %cst {dimension_numbers = #tpu.dot_dimension_numbers<[1], [0], [0], [1], [0, 0, 1, 1], [], []>} : vector<112x128xbf16>, vector<128x128xbf16>, vector<112x128xf32> -> vector<112x128xf32>
    %cst_3 = arith.constant 0.000000e+00 : f32
    %3 = vector.broadcast %cst_3 : f32 to vector<112x128xf32>
    %4 = arith.maximumf %2, %3 : vector<112x128xf32>
    %c0_4 = arith.constant 0 : index
    %c0_5 = arith.constant 0 : index
    %5 = vector.load %arg3[%c0_4, %c0_5] : memref<112x128xf32, #tpu.memory_space<vmem>>, vector<112x128xf32>
    tpu.vector_store %arg3[%c0_4, %c0_5], %4 {strides = array<i32>} : memref<112x128xf32, #tpu.memory_space<vmem>>, vector<112x128xf32>,
    return
  }
  func.func @transform_0(%arg0: i32) -> (i32, i32) {
    %c0_i32 = arith.constant 0 : i32
    %c0_i32_0 = arith.constant 0 : i32
    return %arg0, %c0_i32 : i32, i32
  }
  func.func @transform_1(%arg0: i32) -> (i32, i32) {
    %c0_i32 = arith.constant 0 : i32
    %c0_i32_0 = arith.constant 0 : i32
    %c0_i32_1 = arith.constant 0 : i32
    return %c0_i32, %c0_i32_0 : i32, i32
  }
  func.func @transform_2(%arg0: i32) -> (i32, i32) {
    %c0_i32 = arith.constant 0 : i32
    %c0_i32_0 = arith.constant 0 : i32
    return %arg0, %c0_i32 : i32, i32
  }
}

</mosaic_0001>

<llo_original>
// kernel: tpu_custom_call.1
$region0: #{tpu_custom_call.1}
  #allocation0 [shape = 'u32[]', space=smem, size = 0x4, offset = 0x4, fixed_abs, tag = 'smem constant byte address 0x4 - core index']
  #allocation1 [shape = 'u32[144,128]{1,0:T(1,128)}', space=vmem, size = 0x12000, scoped, tag = 'internal scratch']
  %s0 = inlined_call_operand.hbm [shape: bf16[112,128], index: 0, kind: input, shape index: {}]
  %s1 = inlined_call_operand.hbm [shape: bf16[128,128], index: 1, kind: input, shape index: {}]
  %s2 = inlined_call_operand.hbm [shape: f32[112,128], index: 2, kind: output, shape index: {}]
  %s3 = sld [smem:[#allocation0]]
  $region26: #{tpu_custom_call.1} parent=0
    _
  %s5 = ssub.s32 1, %s3
  %s6 = scalar_select 0, %s5, %s3
  $region1: #{tpu_custom_call.1} parent=0
    #allocation2 [shape = 'u8[28672]{0}', space=vmem, size = 0x7000, scoped, tag = 'input window, operand 0, single buffered']
    #allocation3 [shape = 's32[1]{0}', space=sflag, size = 0x4, scoped, tag = 'scoped memory for tpu_custom_call.1']
    #allocation4 [shape = 's32[1]{0}', space=sflag, size = 0x4, scoped, tag = 'scoped memory for tpu_custom_call.1']
    #allocation5 [shape = 'u8[32768]{0}', space=vmem, size = 0x8000, scoped, tag = 'input window, operand 1, single buffered']
    #allocation6 [shape = 's32[1]{0}', space=sflag, size = 0x4, scoped, tag = 'scoped memory for tpu_custom_call.1']
    #allocation7 [shape = 'u8[57344]{0}', space=vmem, size = 0xe000, scoped, tag = 'output window, operand 0, single buffered']
    %7 = vsyncpa [#allocation3], 0
    %8 = vsyncpa [#allocation6], 0
    %9 = vsyncpa [#allocation4], 0
    // Predicated region
    $region2: #{tpu_custom_call.1} parent=1 // pred_check
      _
    $region3: #{tpu_custom_call.1} parent=1 // pred_check_branch
      %11 = sbr.rel (0) target = $region5
    $region4: #{tpu_custom_call.1} parent=1 // pred_region
      %s13 = ssub.s32 896, 896
      %14 = vsyncadd [#allocation3], %s13
      %s15 = sshll.u32 [#allocation2], 4
      %s16 = int_to_ptr.vmem [resolvable:$true] %s15
      %21 = dma.hbm_to_vmem [thread:$0]  %s0, 896, %s16, [#allocation3], 64, 64, 4
    $region5: #{tpu_custom_call.1} parent=1 // pred_fallthru
      _
    // Predicated region
    $region6: #{tpu_custom_call.1} parent=1 // pred_check
      _
    $region7: #{tpu_custom_call.1} parent=1 // pred_check_branch
      %23 = sbr.rel (0) target = $region9
    $region8: #{tpu_custom_call.1} parent=1 // pred_region
      %s25 = ssub.s32 1024, 1024
      %26 = vsyncadd [#allocation6], %s25
      %s27 = sshll.u32 [#allocation5], 4
      %s28 = int_to_ptr.vmem [resolvable:$true] %s27
      %33 = dma.hbm_to_vmem [thread:$0]  %s1, 1024, %s28, [#allocation6], 64, 64, 4
    $region9: #{tpu_custom_call.1} parent=1 // pred_fallthru
      _
    // Predicated region
    $region10: #{tpu_custom_call.1} parent=1 // pred_check
      _
    $region11: #{tpu_custom_call.1} parent=1 // pred_check_branch
      %35 = sbr.rel (0) target = $region13
    $region12: #{tpu_custom_call.1} parent=1 // pred_region
      %36 = dma.done [#allocation3], 896
    $region13: #{tpu_custom_call.1} parent=1 // pred_fallthru
      _
    // Predicated region
    $region14: #{tpu_custom_call.1} parent=1 // pred_check
      _
    $region15: #{tpu_custom_call.1} parent=1 // pred_check_branch
      %38 = sbr.rel (0) target = $region17
    $region16: #{tpu_custom_call.1} parent=1 // pred_region
      %39 = dma.done [#allocation6], 1024
    $region17: #{tpu_custom_call.1} parent=1 // pred_fallthru
      _
    %v41 = vld [vmem:[#allocation2] sm:$0xf]
    %v42 = vld [vmem:[#allocation2 + $0x4] sm:$0xf]
    %v43 = vld [vmem:[#allocation2 + $0x8] sm:$0xf]
    %v44 = vld [vmem:[#allocation2 + $0xc] sm:$0xf]
    %v45 = vld [vmem:[#allocation2 + $0x10] sm:$0xf]
    %v46 = vld [vmem:[#allocation2 + $0x14] sm:$0xf]
    %v47 = vld [vmem:[#allocation2 + $0x18] sm:$0xf]
    %v48 = vld [vmem:[#allocation2 + $0x1c] sm:$0xf]
    %v49 = vld [vmem:[#allocation2 + $0x20] sm:$0xf]
    %v50 = vld [vmem:[#allocation2 + $0x24] sm:$0xf]
    %v51 = vld [vmem:[#allocation2 + $0x28] sm:$0xf]
    %v52 = vld [vmem:[#allocation2 + $0x2c] sm:$0xf]
    %v53 = vld [vmem:[#allocation2 + $0x30] sm:$0xf]
    %v54 = vld [vmem:[#allocation2 + $0x34] sm:$0xf]
    %v55 = vld [vmem:[#allocation5] sm:$0xf]
    %v56 = vld [vmem:[#allocation5 + $0x4] sm:$0xf]
    %v57 = vld [vmem:[#allocation5 + $0x8] sm:$0xf]
    %v58 = vld [vmem:[#allocation5 + $0xc] sm:$0xf]
    %v59 = vld [vmem:[#allocation5 + $0x10] sm:$0xf]
    %v60 = vld [vmem:[#allocation5 + $0x14] sm:$0xf]
    %v61 = vld [vmem:[#allocation5 + $0x18] sm:$0xf]
    %v62 = vld [vmem:[#allocation5 + $0x1c] sm:$0xf]
    %v63 = vld [vmem:[#allocation5 + $0x20] sm:$0xf]
    %v64 = vld [vmem:[#allocation5 + $0x24] sm:$0xf]
    %v65 = vld [vmem:[#allocation5 + $0x28] sm:$0xf]
    %v66 = vld [vmem:[#allocation5 + $0x2c] sm:$0xf]
    %v67 = vld [vmem:[#allocation5 + $0x30] sm:$0xf]
    %v68 = vld [vmem:[#allocation5 + $0x34] sm:$0xf]
    %v69 = vld [vmem:[#allocation5 + $0x38] sm:$0xf]
    %v70 = vld [vmem:[#allocation5 + $0x3c] sm:$0xf]
    %v85 = vunpack.c.l.b16 %v41
    %v86 = vunpack.c.l.b16 %v42
    %v87 = vunpack.c.l.b16 %v43
    %v88 = vunpack.c.l.b16 %v44
    %v89 = vunpack.c.l.b16 %v45
    %v90 = vunpack.c.l.b16 %v46
    %v91 = vunpack.c.l.b16 %v47
    %v92 = vunpack.c.l.b16 %v48
    %v93 = vunpack.c.l.b16 %v49
    %v94 = vunpack.c.l.b16 %v50
    %v95 = vunpack.c.l.b16 %v51
    %v96 = vunpack.c.l.b16 %v52
    %v97 = vunpack.c.l.b16 %v53
    %v98 = vunpack.c.l.b16 %v54
    %v99 = vpack.c.b16 %v86, %v85
    %v100 = vpack.c.b16 %v88, %v87
    %v101 = vpack.c.b16 %v90, %v89
    %v102 = vpack.c.b16 %v92, %v91
    %v103 = vpack.c.b16 %v94, %v93
    %v104 = vpack.c.b16 %v96, %v95
    %v105 = vpack.c.b16 %v98, %v97
    %v129 = vunpack.c.l.b16 %v55
    %v130 = vunpack.c.l.b16 %v56
    %v131 = vunpack.c.l.b16 %v57
    %v132 = vunpack.c.l.b16 %v58
    %v133 = vunpack.c.l.b16 %v59
    %v134 = vunpack.c.l.b16 %v60
    %v135 = vunpack.c.l.b16 %v61
    %v136 = vunpack.c.l.b16 %v62
    %v137 = vunpack.c.l.b16 %v63
    %v138 = vunpack.c.l.b16 %v64
    %v139 = vunpack.c.l.b16 %v65
    %v140 = vunpack.c.l.b16 %v66
    %v141 = vunpack.c.l.b16 %v67
    %v142 = vunpack.c.l.b16 %v68
    %v143 = vunpack.c.l.b16 %v69
    %v144 = vunpack.c.l.b16 %v70
    %v145 = vpack.c.b16 %v130, %v129
    %v146 = vpack.c.b16 %v132, %v131
    %v147 = vpack.c.b16 %v134, %v133
    %v148 = vpack.c.b16 %v136, %v135
    %v149 = vpack.c.b16 %v138, %v137
    %v150 = vpack.c.b16 %v140, %v139
    %v151 = vpack.c.b16 %v142, %v141
    %v152 = vpack.c.b16 %v144, %v143
    %161 = vmatprep.subr.bf16.mxu0 0
    %162 = vmatpush1.bf16.msra.mxu0 %v145
    %163 = vmatprep.subr.bf16.mxu0 0
    %164 = vmatpush1.bf16.msra.mxu0 %v146
    %165 = vmatprep.subr.bf16.mxu0 0
    %166 = vmatpush1.bf16.msra.mxu0 %v147
    %167 = vmatprep.subr.bf16.mxu0 0
    %168 = vmatpush1.bf16.msra.mxu0 %v148
    %169 = vmatprep.subr.bf16.mxu0 0
    %170 = vmatpush1.bf16.msra.mxu0 %v149
    %171 = vmatprep.subr.bf16.mxu0 0
    %172 = vmatpush1.bf16.msra.mxu0 %v150
    %173 = vmatprep.subr.bf16.mxu0 0
    %174 = vmatpush1.bf16.msra.mxu0 %v151
    %175 = vmatprep.subr.bf16.mxu0 0
    %176 = vmatpush1.bf16.msra.mxu0 %v152
    %177 = vmatprep.subr.bf16.mxu0 0
    %178 = vmatpush1.bf16.msra.mxu0 0
    %179 = vmatprep.subr.bf16.mxu0 0
    %180 = vmatpush1.bf16.msra.mxu0 0
    %181 = vmatprep.subr.bf16.mxu0 0
    %182 = vmatpush1.bf16.msra.mxu0 0
    %183 = vmatprep.subr.bf16.mxu0 0
    %184 = vmatpush1.bf16.msra.mxu0 0
    %185 = vmatprep.subr.bf16.mxu0 0
    %186 = vmatpush1.bf16.msra.mxu0 0
    %187 = vmatprep.subr.bf16.mxu0 0
    %188 = vmatpush1.bf16.msra.mxu0 0
    %189 = vmatprep.subr.bf16.mxu0 0
    %190 = vmatpush1.bf16.msra.mxu0 0
    %191 = vmatprep.subr.bf16.mxu0 0
    %192 = vmatpush1.bf16.msra.mxu0 0
    %193 = vmatprep.mubr.bf16.mxu0 0
    %194 = vmatmul.mubr.bf16.gmra.mrb[0].mxu0 %v99
    %v195 = vpop.f32.mrb[0].mxu0
    %v196 = vadd.f32 0.0, %v195
    %v197 = vpop.f32.mrb[0].mxu0
    %v198 = vpop.f32.mrb[0].mxu0
    %v199 = vadd.f32 0.0, %v198
    %v200 = vpop.f32.mrb[0].mxu0
    %201 = vmatprep.mubr.bf16.mxu0 0
    %202 = vmatmul.mubr.bf16.gmra.mrb[0].mxu0 %v100
    %v203 = vpop.f32.mrb[0].mxu0
    %v204 = vadd.f32 0.0, %v203
    %v205 = vpop.f32.mrb[0].mxu0
    %v206 = vpop.f32.mrb[0].mxu0
    %v207 = vadd.f32 0.0, %v206
    %v208 = vpop.f32.mrb[0].mxu0
    %209 = vmatprep.mubr.bf16.mxu0 0
    %210 = vmatmul.mubr.bf16.gmra.mrb[0].mxu0 %v101
    %v211 = vpop.f32.mrb[0].mxu0
    %v212 = vadd.f32 0.0, %v211
    %v213 = vpop.f32.mrb[0].mxu0
    %v214 = vpop.f32.mrb[0].mxu0
    %v215 = vadd.f32 0.0, %v214
    %v216 = vpop.f32.mrb[0].mxu0
    %217 = vmatprep.mubr.bf16.mxu0 0
    %218 = vmatmul.mubr.bf16.gmra.mrb[0].mxu0 %v102
    %v219 = vpop.f32.mrb[0].mxu0
    %v220 = vadd.f32 0.0, %v219
    %v221 = vpop.f32.mrb[0].mxu0
    %v222 = vpop.f32.mrb[0].mxu0
    %v223 = vadd.f32 0.0, %v222
    %v224 = vpop.f32.mrb[0].mxu0
    %225 = vmatprep.mubr.bf16.mxu0 0
    %226 = vmatmul.mubr.bf16.gmra.mrb[0].mxu0 %v103
    %v227 = vpop.f32.mrb[0].mxu0
    %v228 = vadd.f32 0.0, %v227
    %v229 = vpop.f32.mrb[0].mxu0
    %v230 = vpop.f32.mrb[0].mxu0
    %v231 = vadd.f32 0.0, %v230
    %v232 = vpop.f32.mrb[0].mxu0
    %233 = vmatprep.mubr.bf16.mxu0 0
    %234 = vmatmul.mubr.bf16.gmra.mrb[0].mxu0 %v104
    %v235 = vpop.f32.mrb[0].mxu0
    %v236 = vadd.f32 0.0, %v235
    %v237 = vpop.f32.mrb[0].mxu0
    %v238 = vpop.f32.mrb[0].mxu0
    %v239 = vadd.f32 0.0, %v238
    %v240 = vpop.f32.mrb[0].mxu0
    %241 = vmatprep.mubr.bf16.mxu0 0
    %242 = vmatmul.mubr.bf16.gmra.mrb[0].mxu0 %v105
    %v243 = vpop.f32.mrb[0].mxu0
    %v244 = vadd.f32 0.0, %v243
    %v245 = vpop.f32.mrb[0].mxu0
    %v246 = vpop.f32.mrb[0].mxu0
    %v247 = vadd.f32 0.0, %v246
    %v248 = vpop.f32.mrb[0].mxu0
    %249 = vdwg.mxu0
    %v250 = vmax.f32 %v196, 0.0
    %v251 = vmax.f32 %v199, 0.0
    %v252 = vmax.f32 %v204, 0.0
    %v253 = vmax.f32 %v207, 0.0
    %v254 = vmax.f32 %v212, 0.0
    %v255 = vmax.f32 %v215, 0.0
    %v256 = vmax.f32 %v220, 0.0
    %v257 = vmax.f32 %v223, 0.0
    %v258 = vmax.f32 %v228, 0.0
    %v259 = vmax.f32 %v231, 0.0
    %v260 = vmax.f32 %v236, 0.0
    %v261 = vmax.f32 %v239, 0.0
    %v262 = vmax.f32 %v244, 0.0
    %v263 = vmax.f32 %v247, 0.0
    %264 = vst [vmem:[#allocation7] sm:$0xff] %v250
    %265 = vst [vmem:[#allocation7 + $0x8] sm:$0xff] %v251
    %266 = vst [vmem:[#allocation7 + $0x10] sm:$0xff] %v252
    %267 = vst [vmem:[#allocation7 + $0x18] sm:$0xff] %v253
    %268 = vst [vmem:[#allocation7 + $0x20] sm:$0xff] %v254
    %269 = vst [vmem:[#allocation7 + $0x28] sm:$0xff] %v255
    %270 = vst [vmem:[#allocation7 + $0x30] sm:$0xff] %v256
    %271 = vst [vmem:[#allocation7 + $0x38] sm:$0xff] %v257
    %272 = vst [vmem:[#allocation7 + $0x40] sm:$0xff] %v258
    %273 = vst [vmem:[#allocation7 + $0x48] sm:$0xff] %v259
    %274 = vst [vmem:[#allocation7 + $0x50] sm:$0xff] %v260
    %275 = vst [vmem:[#allocation7 + $0x58] sm:$0xff] %v261
    %276 = vst [vmem:[#allocation7 + $0x60] sm:$0xff] %v262
    %277 = vst [vmem:[#allocation7 + $0x68] sm:$0xff] %v263
    // Predicated region
    $region18: #{tpu_custom_call.1} parent=1 // pred_check
      _
    $region19: #{tpu_custom_call.1} parent=1 // pred_check_branch
      %279 = sbr.rel (0) target = $region21
    $region20: #{tpu_custom_call.1} parent=1 // pred_region
      %s281 = ssub.s32 1792, 1792
      %282 = vsyncadd [#allocation4], %s281
      %s283 = sshll.u32 [#allocation7], 4
      %s284 = int_to_ptr.vmem [resolvable:$true] %s283
      %289 = dma.vmem_to_hbm [thread:$0]  %s284, 1792, %s2, [#allocation4], 128, 128, 8
    $region21: #{tpu_custom_call.1} parent=1 // pred_fallthru
      _
    // Predicated region
    $region22: #{tpu_custom_call.1} parent=1 // pred_check
      _
    $region23: #{tpu_custom_call.1} parent=1 // pred_check_branch
      %291 = sbr.rel (0) target = $region25
    $region24: #{tpu_custom_call.1} parent=1 // pred_region
      %292 = dma.done [#allocation4], 1792
    $region25: #{tpu_custom_call.1} parent=1 // pred_fallthru
      _
    %293 = vsyncpa [#allocation3], 1
    %294 = vsyncpa [#allocation6], 1
    %295 = vsyncpa [#allocation4], 1

</llo_original>
